<compile_context>
chip_gen: v7x
topology: tpu7x:2x2x1
jax: 0.10.0
libtpu: 0.0.40
codegen_flags: <defaults>
</compile_context>

<pallas_src>
import functools

import jax
import jax.numpy as jnp
from jax.experimental import pallas as pl
from jax.experimental.pallas import tpu as pltpu


def _round_up(x: int, m: int) -> int:
    return ((x + m - 1) // m) * m


# --------------------------------------------------------------------------
# Conv layer kernel: stride-1 conv (taps accumulated in-kernel) + bias + LReLU
# Input is already padded and space-to-depth'd by the original stride, so all
# tap reads are contiguous static slices of the VMEM block (no strided loads).
# --------------------------------------------------------------------------
def _conv_s1_kernel(x_ref, w_ref, b_ref, o_ref, *, kh_taps, kw_taps, oh, ow, alpha):
    cs = x_ref.shape[-1]
    cout = o_ref.shape[-1]
    xfull = x_ref[0]                                  # (Hs, Ws, Cs) bf16, one load
    acc = jnp.zeros((oh * ow, cout), jnp.float32)
    t = 0
    for kh in range(kh_taps):                          # static unroll over taps
        for kw in range(kw_taps):
            slab = jax.lax.slice(xfull, (kh, kw, 0), (kh + oh, kw + ow, cs))
            a = slab.reshape(oh * ow, cs)              # (M, K) bf16
            acc = acc + jnp.dot(a, w_ref[t], preferred_element_type=jnp.float32)
            t += 1
    acc = acc + b_ref[...]                             # (1, Cout) f32 bias
    if alpha != 1.0:                                   # compile-time skip for linear
        acc = jnp.where(acc >= 0.0, acc, alpha * acc)
    o_ref[...] = acc.reshape(1, oh, ow, cout).astype(o_ref.dtype)


def conv_layer(x_s2d, w_taps, bias, kh_taps, kw_taps, alpha):
    """x_s2d: (B, Hs, Ws, Cs) bf16, w_taps: (T, Cs, Cout) bf16, bias: (1, Cout) f32."""
    B, Hs, Ws, Cs = x_s2d.shape
    T, K, Cout = w_taps.shape
    assert K == Cs and T == kh_taps * kw_taps
    OH, OW = Hs - kh_taps + 1, Ws - kw_taps + 1
    kernel = functools.partial(_conv_s1_kernel, kh_taps=kh_taps, kw_taps=kw_taps,
                               oh=OH, ow=OW, alpha=alpha)
    return pl.pallas_call(
        kernel,
        out_shape=jax.ShapeDtypeStruct((B, OH, OW, Cout), jnp.bfloat16),
        grid=(B,),
        in_specs=[
            pl.BlockSpec((1, Hs, Ws, Cs), lambda b: (b, 0, 0, 0)),
            pl.BlockSpec((T, K, Cout), lambda b: (0, 0, 0)),
            pl.BlockSpec((1, Cout), lambda b: (0, 0)),
        ],
        out_specs=pl.BlockSpec((1, OH, OW, Cout), lambda b: (b, 0, 0, 0)),
        compiler_params=pltpu.CompilerParams(dimension_semantics=("parallel",)),
    )(x_s2d, w_taps, bias)


# --------------------------------------------------------------------------
# Final conv layer fused with logit reductions.
# Weight Cout is zero-padded 1 -> 128 (lane-dense matmul); only lane 0 is the
# real logit, masked inside the kernel. Accumulates 4 SMEM scalars across the
# batch grid: [sum relu(1 - logit) | real, sum relu(1 + logit) | fake,
#              sum logit | real,    sum logit | fake].
# --------------------------------------------------------------------------
def _final_conv_reduce_kernel(x_ref, w_ref, b_ref, o_ref, *,
                              kh_taps, kw_taps, oh, ow, n_real):
    b = pl.program_id(0)

    @pl.when(b == 0)
    def _():
        o_ref[0, 0] = 0.0
        o_ref[0, 1] = 0.0
        o_ref[0, 2] = 0.0
        o_ref[0, 3] = 0.0

    cs = x_ref.shape[-1]
    cp = w_ref.shape[-1]                               # padded Cout (128)
    xfull = x_ref[0]
    acc = jnp.zeros((oh * ow, cp), jnp.float32)
    t = 0
    for kh in range(kh_taps):
        for kw in range(kw_taps):
            slab = jax.lax.slice(xfull, (kh, kw, 0), (kh + oh, kw + ow, cs))
            a = slab.reshape(oh * ow, cs)
            acc = acc + jnp.dot(a, w_ref[t], preferred_element_type=jnp.float32)
            t += 1
    acc = acc + b_ref[...]                             # junk lanes stay exactly 0

    mask = (jax.lax.broadcasted_iota(jnp.int32, acc.shape, 1) == 0).astype(jnp.float32)
    s_logit = jnp.sum(acc * mask)
    s_relu_real = jnp.sum(jnp.maximum(1.0 - acc, 0.0) * mask)
    s_relu_fake = jnp.sum(jnp.maximum(1.0 + acc, 0.0) * mask)

    is_real = jnp.where(b < n_real, 1.0, 0.0)          # n_real is static
    o_ref[0, 0] += is_real * s_relu_real
    o_ref[0, 1] += (1.0 - is_real) * s_relu_fake
    o_ref[0, 2] += is_real * s_logit
    o_ref[0, 3] += (1.0 - is_real) * s_logit


def final_conv_reduce(x_pad, w_taps, bias, kh_taps, kw_taps, n_real):
    B, Hs, Ws, Cs = x_pad.shape
    T, K, Cp = w_taps.shape
    assert K == Cs and T == kh_taps * kw_taps
    OH, OW = Hs - kh_taps + 1, Ws - kw_taps + 1
    kernel = functools.partial(_final_conv_reduce_kernel, kh_taps=kh_taps,
                               kw_taps=kw_taps, oh=OH, ow=OW, n_real=n_real)
    sums = pl.pallas_call(
        kernel,
        out_shape=jax.ShapeDtypeStruct((1, 4), jnp.float32),
        grid=(B,),
        in_specs=[
            pl.BlockSpec((1, Hs, Ws, Cs), lambda b: (b, 0, 0, 0)),
            pl.BlockSpec((T, K, Cp), lambda b: (0, 0, 0)),
            pl.BlockSpec((1, Cp), lambda b: (0, 0)),
        ],
        out_specs=pl.BlockSpec((1, 4), lambda b: (0, 0),
                               memory_space=pltpu.MemorySpace.SMEM),
        compiler_params=pltpu.CompilerParams(dimension_semantics=("arbitrary",)),
    )(x_pad, w_taps, bias)
    return sums, OH * OW                               # sums and logits-per-image


# --------------------------------------------------------------------------
# Gridded scalar reductions (L1 / MSE / KL) with a persistent SMEM accumulator
# --------------------------------------------------------------------------
def _make_sum2_kernel(elem_fn):
    def kernel(x_ref, y_ref, o_ref):
        @pl.when(pl.program_id(0) == 0)
        def _():
            o_ref[0, 0] = 0.0
        o_ref[0, 0] += jnp.sum(elem_fn(x_ref[...], y_ref[...]))
    return kernel


def _sum2(x, y, elem_fn, tile_rows=2048):
    """Sum of elem_fn(x, y) over all elements (elem_fn(0,0) must be 0)."""
    fx = x.reshape(-1).astype(jnp.float32)
    fy = y.reshape(-1).astype(jnp.float32)
    n = fx.shape[0]
    rows = _round_up(pl.cdiv(n, 128), 8)
    tr = min(tile_rows, rows)
    rows_p = _round_up(rows, tr)
    pad = rows_p * 128 - n
    xt = jnp.pad(fx, (0, pad)).reshape(rows_p, 128)
    yt = jnp.pad(fy, (0, pad)).reshape(rows_p, 128)
    s = pl.pallas_call(
        _make_sum2_kernel(elem_fn),
        out_shape=jax.ShapeDtypeStruct((1, 1), jnp.float32),
        grid=(rows_p // tr,),
        in_specs=[pl.BlockSpec((tr, 128), lambda i: (i, 0)),
                  pl.BlockSpec((tr, 128), lambda i: (i, 0))],
        out_specs=pl.BlockSpec((1, 1), lambda i: (0, 0),
                               memory_space=pltpu.MemorySpace.SMEM),
        compiler_params=pltpu.CompilerParams(dimension_semantics=("arbitrary",)),
    )(xt, yt)
    return s[0, 0], n


def l1_loss(x, y):
    s, n = _sum2(x, y, lambda a, b: jnp.abs(a - b))
    return s / n


def mse_loss(x, y):
    s, n = _sum2(x, y, lambda a, b: (a - b) * (a - b))
    return s / n


def kl_mean(mu, logvar):
    """mean over batch of 0.5 * sum_{c,h,w}(mu^2 + var - 1 - logvar)."""
    B = mu.shape[0]
    s, _ = _sum2(mu, logvar, lambda m, lv: m * m + jnp.exp(lv) - 1.0 - lv)
    return 0.5 * s / B


# --------------------------------------------------------------------------
# Synthetic PatchGAN discriminator (Conv k4 s2 p1 + LReLU(0.2) x2, then
# Conv k4 s1 p1 -> 1-channel logits). Weights N(0, 0.02), zero bias.
# TODO(synk): PatchGANDiscriminator source is not provided; this is a standard
# 3-layer PatchGAN without norm layers.
# --------------------------------------------------------------------------
def _prep_conv_weight(w, b, stride, pad_cout_to=None):
    """Fold the stride into channels (matches _pad_s2d), pre-pad Cout, cast bf16.
    Returns (w_taps (T, s*s*Cin, Cout) bf16, bias (1, Cout) f32, (KHs, KWs))."""
    KH, KW, Cin, Cout = w.shape
    if pad_cout_to is not None and Cout < pad_cout_to:
        w = jnp.concatenate(
            [w, jnp.zeros((KH, KW, Cin, pad_cout_to - Cout), w.dtype)], axis=-1)
        b = jnp.concatenate([b, jnp.zeros((pad_cout_to - Cout,), b.dtype)])
        Cout = pad_cout_to
    s = stride
    if s > 1:
        assert KH % s == 0 and KW % s == 0
        w = w.reshape(KH // s, s, KW // s, s, Cin, Cout)
        w = w.transpose(0, 2, 1, 3, 4, 5).reshape(KH // s, KW // s, s * s * Cin, Cout)
    KHs, KWs = w.shape[0], w.shape[1]
    w_taps = w.reshape(KHs * KWs, w.shape[2], Cout).astype(jnp.bfloat16)
    bias = b.reshape(1, Cout).astype(jnp.float32)
    return w_taps, bias, (KHs, KWs)


def _pad_s2d(x, pad, stride):
    """Zero-pad spatially, then space-to-depth by `stride` (stride-folding)."""
    B, H, W, C = x.shape
    xp = jnp.pad(x, ((0, 0), (pad, pad), (pad, pad), (0, 0)))
    if stride == 1:
        return xp
    s = stride
    Hp, Wp = H + 2 * pad, W + 2 * pad
    assert Hp % s == 0 and Wp % s == 0, "padded spatial dims must divide the stride"
    xp = xp.reshape(B, Hp // s, s, Wp // s, s, C)
    return xp.transpose(0, 1, 3, 2, 4, 5).reshape(B, Hp // s, Wp // s, s * s * C)


def init_discriminator(key, in_channels, channels=64):
    k1, k2, k3 = jax.random.split(key, 3)
    w1 = 0.02 * jax.random.normal(k1, (4, 4, in_channels, channels), jnp.float32)
    b1 = jnp.zeros((channels,), jnp.float32)
    w2 = 0.02 * jax.random.normal(k2, (4, 4, channels, 2 * channels), jnp.float32)
    b2 = jnp.zeros((2 * channels,), jnp.float32)
    w3 = 0.02 * jax.random.normal(k3, (4, 4, 2 * channels, 1), jnp.float32)
    b3 = jnp.zeros((1,), jnp.float32)
    w1t, b1t, t1 = _prep_conv_weight(w1, b1, stride=2)
    w2t, b2t, t2 = _prep_conv_weight(w2, b2, stride=2)
    w3t, b3t, t3 = _prep_conv_weight(w3, b3, stride=1, pad_cout_to=128)
    return {
        "l1": (w1t, b1t, t1, 2, 1),   # (w_taps, bias, (KHs, KWs), stride, pad)
        "l2": (w2t, b2t, t2, 2, 1),
        "l3": (w3t, b3t, t3, 1, 1),
    }


def discriminator_logit_sums(params, x_nchw, n_real):
    """PatchGAN forward with the final conv fused into logit reductions.
    Returns ((1,4) sums [relu(1-l)|real, relu(1+l)|fake, l|real, l|fake],
    logits-per-image)."""
    x = jnp.transpose(x_nchw, (0, 2, 3, 1)).astype(jnp.bfloat16)   # NCHW -> NHWC bf16
    for name in ("l1", "l2"):
        w_taps, bias, (khs, kws), stride, pad = params[name]
        x = _pad_s2d(x, pad, stride)
        x = conv_layer(x, w_taps, bias, khs, kws, alpha=0.2)
    w_taps, bias, (khs, kws), stride, pad = params["l3"]
    x = _pad_s2d(x, pad, stride)
    return final_conv_reduce(x, w_taps, bias, khs, kws, n_real)


# --------------------------------------------------------------------------
# RecKLDiscriminatorLoss
# --------------------------------------------------------------------------
def adopt_weight(weight, global_step, threshold=0, value=0.0):
    if isinstance(global_step, (int, float)):
        return weight if global_step >= threshold else value
    return jnp.where(global_step < threshold, value, weight)   # traced-step safe


class RecKLDiscriminatorLoss:
    def __init__(self, config, key):
        loss_cfg = config["config"]["loss"]
        data_cfg = config["config"]["data"]
        self.kl_weight = loss_cfg["kl_weight"]
        self.discriminator_weight = loss_cfg["discriminator_weight"]
        self.disc_factor = 1.0
        self.discriminator_start_steps = loss_cfg["discriminator_start_steps"]
        self.disc_params = init_discriminator(key, data_cfg["in_channels"], channels=64)
        rec = loss_cfg["reconstruction_loss"]
        if rec == "l1":
            self.rec_loss_fn = l1_loss
        elif rec == "mse":
            self.rec_loss_fn = mse_loss
        else:
            # TODO(synk): 'rmse' (WeightedRMSELoss) returns a per-batch vector in
            # the reference and is not supported in this scalar-loss kernel set.
            raise ValueError("only 'l1'/'mse' supported in this synthetic kernel")

    def __call__(self, inputs, reconstructions, posterior_mean, posterior_logvar,
                 global_step, optimizer, last_layer=None):
        disc_factor = adopt_weight(self.disc_factor, global_step,
                                   threshold=self.discriminator_start_steps, value=0.0)
        if optimizer == "Generator":
            rec_loss = self.rec_loss_fn(reconstructions, inputs)
            kl_loss = self.kl_weight * kl_mean(posterior_mean, posterior_logvar)
            sums, lpi = discriminator_logit_sums(self.disc_params, reconstructions,
                                                 n_real=0)
            n_fake = reconstructions.shape[0] * lpi
            g_loss = -(sums[0, 3] / n_fake)
            # TODO(synk): adaptive d_weight needs torch.autograd.grad through the
            # generator's last layer (not representable in a forward-only kernel);
            # we take the reference's eval-mode RuntimeError fallback d_weight = 0.
            d_weight = jnp.float32(0.0)
            loss = rec_loss + kl_loss + d_weight * disc_factor * g_loss
            log = {
                "total_loss": loss,
                "kl_loss": kl_loss,
                "rec_loss": rec_loss,
                "d_weight": d_weight,
                "disc_factor": jnp.asarray(disc_factor, jnp.float32),
                "g_loss": g_loss,
            }
            return loss, log
        elif optimizer == "Discriminator":
            B = inputs.shape[0]
            both = jnp.concatenate([inputs, reconstructions], axis=0)  # one disc pass
            sums, lpi = discriminator_logit_sums(self.disc_params, both, n_real=B)
            n_half = B * lpi
            d_loss = disc_factor * 0.5 * (sums[0, 0] / n_half + sums[0, 1] / n_half)
            log = {
                "d_loss": d_loss,
                "logits_real": sums[0, 2] / n_half,
                "logits_fake": sums[0, 3] / n_half,
            }
            return d_loss, log
        else:
            raise ValueError(f"Invalid optimizer mode: {optimizer}")


if __name__ == "__main__":
    config = {
        "config": {
            "loss": {
                "kl_weight": 1e-6,
                "discriminator_weight": 0.5,
                "discriminator_start_steps": 0,
                "reconstruction_loss": "l1",
            },
            "data": {"in_channels": 4, "out_channels": 4, "y": 16},
        }
    }

    key = jax.random.PRNGKey(0)
    k_in, k_rec, k_mu, k_lv, k_disc = jax.random.split(key, 5)
    inputs = jax.random.normal(k_in, (2, 4, 16, 16), jnp.float32)          # NCHW
    reconstructions = jax.random.normal(k_rec, (2, 4, 16, 16), jnp.float32)
    posterior_mean = jax.random.normal(k_mu, (2, 4, 4, 4), jnp.float32)
    posterior_logvar = 0.1 * jax.random.normal(k_lv, (2, 4, 4, 4), jnp.float32)

    module = RecKLDiscriminatorLoss(config, k_disc)

    g_loss_val, g_log = module(inputs, reconstructions, posterior_mean,
                               posterior_logvar, global_step=10,
                               optimizer="Generator", last_layer=None)
    d_loss_val, d_log = module(inputs, reconstructions, posterior_mean,
                               posterior_logvar, global_step=10,
                               optimizer="Discriminator", last_layer=None)

    jax.block_until_ready((g_loss_val, d_loss_val,
                           {k: v for k, v in g_log.items()},
                           {k: v for k, v in d_log.items()}))
    print("KERNEL_OK")
</pallas_src>

<mosaic_0001>
module attributes {stable_mosaic.version = 11 : i64} {
  func.func @kernel(%arg0: i32, %arg1: memref<16x128xf32, #tpu.memory_space<vmem>>, %arg2: memref<16x128xf32, #tpu.memory_space<vmem>>, %arg3: memref<1x1xf32, #tpu.memory_space<smem>>) attributes {dimension_semantics = [#tpu.dimension_semantics<arbitrary>], iteration_bounds = array<i64: 1>, scalar_prefetch = 0 : i64, scratch_operands = 0 : i64, tpu.core_type = #tpu.core_type<tc>, window_params = [{transform_indices = @transform_0, window_bounds = array<i64: 16, 128>}, {transform_indices = @transform_1, window_bounds = array<i64: 16, 128>}, {transform_indices = @transform_2, window_bounds = array<i64: 1, 1>}]} {
    %c0_i32 = arith.constant 0 : i32
    %0 = arith.cmpi eq, %arg0, %c0_i32 : i32
    %1 = arith.extui %0 : i1 to i32
    %c0_i32_0 = arith.constant 0 : i32
    %2 = arith.cmpi ne, %1, %c0_i32_0 : i32
    scf.if %2 {
      %cst_8 = arith.constant 0.000000e+00 : f32
      %c0_9 = arith.constant 0 : index
      %c0_10 = arith.constant 0 : index
      %14 = memref.load %arg3[%c0_9, %c0_10] : memref<1x1xf32, #tpu.memory_space<smem>>
      memref.store %cst_8, %arg3[%c0_9, %c0_10] : memref<1x1xf32, #tpu.memory_space<smem>>
    } else {
    }
    %c0 = arith.constant 0 : index
    %c0_1 = arith.constant 0 : index
    %3 = memref.load %arg3[%c0, %c0_1] : memref<1x1xf32, #tpu.memory_space<smem>>
    %c0_2 = arith.constant 0 : index
    %c0_3 = arith.constant 0 : index
    %4 = vector.load %arg1[%c0_2, %c0_3] : memref<16x128xf32, #tpu.memory_space<vmem>>, vector<16x128xf32>
    %c0_4 = arith.constant 0 : index
    %c0_5 = arith.constant 0 : index
    %5 = vector.load %arg2[%c0_4, %c0_5] : memref<16x128xf32, #tpu.memory_space<vmem>>, vector<16x128xf32>
    %6 = arith.subf %4, %5 : vector<16x128xf32>
    %7 = math.absf %6 : vector<16x128xf32>
    %8 = vector.shape_cast %7 : vector<16x128xf32> to vector<1x16x128xf32>
    %cst = arith.constant dense<0.000000e+00> : vector<1xf32>
    %9 = vector.multi_reduction <add>, %8, %cst [1, 2] : vector<1x16x128xf32> to vector<1xf32>
    %10 = vector.shape_cast %9 : vector<1xf32> to vector<1x1x1xf32>
    %11 = vector.extract %10[0, 0, 0] : f32 from vector<1x1x1xf32>
    %12 = arith.addf %3, %11 : f32
    %c0_6 = arith.constant 0 : index
    %c0_7 = arith.constant 0 : index
    %13 = memref.load %arg3[%c0_6, %c0_7] : memref<1x1xf32, #tpu.memory_space<smem>>
    memref.store %12, %arg3[%c0_6, %c0_7] : memref<1x1xf32, #tpu.memory_space<smem>>
    return
  }
  func.func @transform_0(%arg0: i32) -> (i32, i32) {
    %c0_i32 = arith.constant 0 : i32
    %c0_i32_0 = arith.constant 0 : i32
    return %arg0, %c0_i32 : i32, i32
  }
  func.func @transform_1(%arg0: i32) -> (i32, i32) {
    %c0_i32 = arith.constant 0 : i32
    %c0_i32_0 = arith.constant 0 : i32
    return %arg0, %c0_i32 : i32, i32
  }
  func.func @transform_2(%arg0: i32) -> (i32, i32) {
    %c0_i32 = arith.constant 0 : i32
    %c0_i32_0 = arith.constant 0 : i32
    %c0_i32_1 = arith.constant 0 : i32
    return %c0_i32, %c0_i32_0 : i32, i32
  }
}

</mosaic_0001>

<llo_original>
// kernel: tpu_custom_call.1
$region0: #{tpu_custom_call.1}
  #allocation0 [shape = 'u32[]', space=smem, size = 0x4, offset = 0x4, fixed_abs, tag = 'smem constant byte address 0x4 - core index']
  #allocation1 [shape = 'u32[144,128]{1,0:T(1,128)}', space=vmem, size = 0x12000, scoped, tag = 'internal scratch']
  %s0 = inlined_call_operand.hbm [shape: f32[16,128], index: 0, kind: input, shape index: {}]
  %s1 = inlined_call_operand.hbm [shape: f32[16,128], index: 1, kind: input, shape index: {}]
  %s2 = inlined_call_operand.hbm [shape: f32[1,1], index: 2, kind: output, shape index: {}]
  %s3 = sld [smem:[#allocation0]]
  $region30: #{tpu_custom_call.1} parent=0
    _
  %s5 = ssub.s32 1, %s3
  %s6 = scalar_select 0, %s5, %s3
  $region1: #{tpu_custom_call.1} parent=0
    #allocation2 [shape = 'u8[8192]{0}', space=vmem, size = 0x2000, scoped, tag = 'input window, operand 0, single buffered']
    #allocation3 [shape = 's32[1]{0}', space=sflag, size = 0x4, scoped, tag = 'scoped memory for tpu_custom_call.1']
    #allocation4 [shape = 's32[1]{0}', space=sflag, size = 0x4, scoped, tag = 'scoped memory for tpu_custom_call.1']
    #allocation5 [shape = 'u8[8192]{0}', space=vmem, size = 0x2000, scoped, tag = 'input window, operand 1, single buffered']
    #allocation6 [shape = 's32[1]{0}', space=sflag, size = 0x4, scoped, tag = 'scoped memory for tpu_custom_call.1']
    #allocation7 [shape = 'u8[512]{0}', space=smem, size = 0x200, scoped, tag = 'output window, operand 0, single buffered']
    %7 = vsyncpa [#allocation3], 0
    %8 = vsyncpa [#allocation6], 0
    %9 = vsyncpa [#allocation4], 0
    // Predicated region
    $region2: #{tpu_custom_call.1} parent=1 // pred_check
      _
    $region3: #{tpu_custom_call.1} parent=1 // pred_check_branch
      %11 = sbr.rel (0) target = $region5
    $region4: #{tpu_custom_call.1} parent=1 // pred_region
      %s13 = ssub.s32 256, 256
      %14 = vsyncadd [#allocation3], %s13
      %s15 = sshll.u32 [#allocation2], 4
      %s16 = int_to_ptr.vmem [resolvable:$true] %s15
      %21 = dma.hbm_to_vmem [thread:$0]  %s0, 256, %s16, [#allocation3], 128, 128, 8
    $region5: #{tpu_custom_call.1} parent=1 // pred_fallthru
      _
    // Predicated region
    $region6: #{tpu_custom_call.1} parent=1 // pred_check
      _
    $region7: #{tpu_custom_call.1} parent=1 // pred_check_branch
      %23 = sbr.rel (0) target = $region9
    $region8: #{tpu_custom_call.1} parent=1 // pred_region
      %s25 = ssub.s32 256, 256
      %26 = vsyncadd [#allocation6], %s25
      %s27 = sshll.u32 [#allocation5], 4
      %s28 = int_to_ptr.vmem [resolvable:$true] %s27
      %33 = dma.hbm_to_vmem [thread:$0]  %s1, 256, %s28, [#allocation6], 128, 128, 8
    $region9: #{tpu_custom_call.1} parent=1 // pred_fallthru
      _
    // Predicated region
    $region10: #{tpu_custom_call.1} parent=1 // pred_check
      _
    $region11: #{tpu_custom_call.1} parent=1 // pred_check_branch
      %35 = sbr.rel (0) target = $region13
    $region12: #{tpu_custom_call.1} parent=1 // pred_region
      %36 = dma.done [#allocation3], 256
    $region13: #{tpu_custom_call.1} parent=1 // pred_fallthru
      _
    // Predicated region
    $region14: #{tpu_custom_call.1} parent=1 // pred_check
      _
    $region15: #{tpu_custom_call.1} parent=1 // pred_check_branch
      %38 = sbr.rel (0) target = $region17
    $region16: #{tpu_custom_call.1} parent=1 // pred_region
      %39 = dma.done [#allocation6], 256
    $region17: #{tpu_custom_call.1} parent=1 // pred_fallthru
      _
    %p40 = scmp.eq.s32.totalorder 0, 0
    // Predicated region
    $region18: #{tpu_custom_call.1} parent=1 // pred_check
      %p41 = pneg %p40
    $region19: #{tpu_custom_call.1} parent=1 // pred_check_branch
      %43 = sbr.rel (%p41) target = $region21
    $region20: #{tpu_custom_call.1} parent=1 // pred_region
      %s44 = scalar_lea.smem [#allocation7], 0
      %45 = sst [smem:[%s44]] 0.0
    $region21: #{tpu_custom_call.1} parent=1 // pred_fallthru
      _
    %s46 = sld [smem:[#allocation7]]
    %v47 = vld [vmem:[#allocation2] sm:$0xff]
    %v48 = vld [vmem:[#allocation2 + $0x8] sm:$0xff]
    %v49 = vld [vmem:[#allocation5] sm:$0xff]
    %v50 = vld [vmem:[#allocation5 + $0x8] sm:$0xff]
    %v51 = vsub.f32 %v47, %v49
    %v52 = vsub.f32 %v48, %v50
    %v53 = vand.u32 2147483647, %v51
    %v54 = vand.u32 2147483647, %v52
    %v55 = vadd.f32 %v53, %v54
    %56 = vadd.xlane.f32.xlu0 %v55
    %v57 = vpop.xlane.xlu0 %56
    %v58 = vrot.slane %v57, 4
    %v59 = vadd.f32 %v57, %v58
    %v60 = vrot.slane %v59, 2
    %v61 = vadd.f32 %v59, %v60
    %v62 = vrot.slane %v61, 1
    %v63 = vadd.f32 %v61, %v62
    %s64 = vtos %v63
    %s65 = sadd.f32 %s46, %s64
    %s66 = scalar_lea.smem [#allocation7], 0
    %67 = sst [smem:[%s66]] %s65
    // Predicated region
    $region22: #{tpu_custom_call.1} parent=1 // pred_check
      _
    $region23: #{tpu_custom_call.1} parent=1 // pred_check_branch
      %69 = sbr.rel (0) target = $region25
    $region24: #{tpu_custom_call.1} parent=1 // pred_region
      %s71 = ssub.s32 16, 16
      %72 = vsyncadd [#allocation4], %s71
      %75 = dma.smem_to_hbm [#allocation7], 16, %s2, [#allocation4]
    $region25: #{tpu_custom_call.1} parent=1 // pred_fallthru
      _
    // Predicated region
    $region26: #{tpu_custom_call.1} parent=1 // pred_check
      _
    $region27: #{tpu_custom_call.1} parent=1 // pred_check_branch
      %77 = sbr.rel (0) target = $region29
    $region28: #{tpu_custom_call.1} parent=1 // pred_region
      %78 = dma.done [#allocation4], 16
    $region29: #{tpu_custom_call.1} parent=1 // pred_fallthru
      _
    %79 = sfence
    %80 = vsyncpa [#allocation3], 1
    %81 = vsyncpa [#allocation6], 1
    %82 = vsyncpa [#allocation4], 1

</llo_original>
